<compile_context>
chip_gen: v6e
topology: v6e:2x2x1
jax: 0.10.0
libtpu: 0.0.40
codegen_flags: <defaults>
</compile_context>

<pallas_src>
import numpy as np
import jax
import jax.numpy as jnp
from jax.experimental import pallas as pl
from jax.experimental.pallas import tpu as pltpu


def critic_kernel(x_ref, w1_ref, b1_ref, w2_ref, b2_ref, w3_ref, b3_ref, o_ref):
    # fc1 + relu  (MXU matmul, f32 accumulation)
    h1 = jnp.dot(x_ref[...], w1_ref[...], preferred_element_type=jnp.float32)
    h1 = jnp.maximum(h1 + b1_ref[...], 0.0)
    # fc2 + relu
    h2 = jnp.dot(h1, w2_ref[...], preferred_element_type=jnp.float32)
    h2 = jnp.maximum(h2 + b2_ref[...], 0.0)
    # fc3 value head, produced directly as a lane-dense (1, TB) row:
    #   (1, fc2) . (TB, fc2)^T  ->  (1, TB)   (tiny matmul; MXU is idle here,
    # and the row layout gives unmasked lane-dense output stores).
    v = jax.lax.dot_general(
        w3_ref[...], h2,
        dimension_numbers=(((1,), (1,)), ((), ())),
        preferred_element_type=jnp.float32,
    ) + b3_ref[0]
    o_ref[...] = v.astype(o_ref.dtype)


def _round_up(x, m):
    return ((x + m - 1) // m) * m


def _default_block_batch():
    """Generation-aware batch tile: 1024 on v6e/v7x, 512 otherwise (v5e, etc.)."""
    try:
        kind = jax.devices()[0].device_kind.lower()
        if "v6" in kind or "v7" in kind:
            return 1024
    except Exception:
        pass
    return 512


def critic_forward(state, params, block_batch=None):
    """state: (B, state_size) f32. params: dict of w1,b1,w2,b2,w3,b3.

    w1: (state_size, fc1), w2: (fc1, fc2), w3: (1, fc2), b1: (1, fc1),
    b2: (1, fc2), b3: (1,).  Returns (B, 1) f32.
    """
    B, S = state.shape
    w1, b1, w2, b2, w3, b3 = (params[k] for k in ("w1", "b1", "w2", "b2", "w3", "b3"))

    # Batch tile: large by default (fewer grid steps), clamped for small batches
    # so tiny inference calls don't compute dead rows. Sublane-8 multiple.
    TB = _default_block_batch() if block_batch is None else block_batch
    TB = min(TB, _round_up(B, 8))
    num_tiles = pl.cdiv(B, TB)
    padded_B = num_tiles * TB
    # NOTE: no jnp.pad of `state`. The last (ragged) tile's DMA is clamped to
    # the array bounds by Pallas; any stale rows only affect output columns
    # >= B, which are sliced off below.

    resident = lambda a: pl.BlockSpec(a.shape, lambda i: (0,) * a.ndim)  # noqa: E731

    out_row = pl.pallas_call(
        critic_kernel,
        out_shape=jax.ShapeDtypeStruct((1, padded_B), jnp.float32),
        grid=(num_tiles,),
        in_specs=[
            # state: streamed per batch tile (pipelined/double-buffered)
            pl.BlockSpec((TB, S), lambda i: (i, 0)),
            # weights/biases: same block every step -> DMA'd once, VMEM-resident
            resident(w1),
            resident(b1),
            resident(w2),
            resident(b2),
            resident(w3),
            # b3: single scalar, lives in SMEM (no VMEM tile / DMA)
            pl.BlockSpec(memory_space=pltpu.MemorySpace.SMEM),
        ],
        # Lane-dense output slab: one (1, TB) row per grid step.
        out_specs=pl.BlockSpec((1, TB), lambda i: (0, i)),
        compiler_params=pltpu.CompilerParams(
            dimension_semantics=("parallel",),  # megacore sharding on dual-TC parts
        ),
    )(state, w1, b1, w2, b2, w3, b3)

    # (1, padded_B) row -> (B, 1) column, dropping any ragged-tile tail.
    return out_row[0, :B].reshape(B, 1)


def init_critic_params(key, state_size, fc1_size, fc2_size):
    """Deterministic init mirroring Critic.reset_parameters():
      fc1.weight ~ U(-1/sqrt(fan), 1/sqrt(fan)) with fan = weight.size(0)
      (= out_features, as in the original w_init), same for fc2;
      fc3.weight ~ U(-3e-3, 3e-3).
      Biases use PyTorch Linear default U(-1/sqrt(in), 1/sqrt(in)).
      Weights stored as (in, out); w3 stored as a (1, fc2) row; b3 as (1,)."""
    ks = jax.random.split(key, 6)

    def uni(k, shape, lim):
        return jax.random.uniform(k, shape, jnp.float32, -lim, lim)

    lim1 = 1.0 / np.sqrt(fc1_size)   # w_init uses weight.size()[0] == out_features
    lim2 = 1.0 / np.sqrt(fc2_size)
    params = {
        "w1": uni(ks[0], (state_size, fc1_size), lim1),
        "b1": uni(ks[1], (1, fc1_size), 1.0 / np.sqrt(state_size)),
        "w2": uni(ks[2], (fc1_size, fc2_size), lim2),
        "b2": uni(ks[3], (1, fc2_size), 1.0 / np.sqrt(fc1_size)),
        "w3": uni(ks[4], (1, fc2_size), 0.003),
        "b3": uni(ks[5], (1,), 1.0 / np.sqrt(fc2_size)),
    }
    return params


if __name__ == "__main__":
    key = jax.random.PRNGKey(0)
    k_param, k_state = jax.random.split(key)

    batch = 8
    state_size = 33      # e.g. Reacher environment observation size
    fc1_size = 64
    fc2_size = 32

    params = init_critic_params(k_param, state_size, fc1_size, fc2_size)
    state = jax.random.normal(k_state, (batch, state_size), jnp.float32)

    out = critic_forward(state, params)
    out = jax.block_until_ready(out)

    # Pure-JAX reference check
    ref = jnp.maximum(state @ params["w1"] + params["b1"], 0.0)
    ref = jnp.maximum(ref @ params["w2"] + params["b2"], 0.0)
    ref = ref @ params["w3"].T + params["b3"]
    np.testing.assert_allclose(np.asarray(out), np.asarray(ref), rtol=1e-5, atol=1e-5)

    assert out.shape == (batch, 1)
    print("KERNEL_OK")
</pallas_src>

<mosaic_0001>
module attributes {stable_mosaic.version = 11 : i64} {
  func.func @critic_kernel(%arg0: i32, %arg1: memref<8x33xf32, #tpu.memory_space<vmem>>, %arg2: memref<33x64xf32, #tpu.memory_space<vmem>>, %arg3: memref<1x64xf32, #tpu.memory_space<vmem>>, %arg4: memref<64x32xf32, #tpu.memory_space<vmem>>, %arg5: memref<1x32xf32, #tpu.memory_space<vmem>>, %arg6: memref<1x32xf32, #tpu.memory_space<vmem>>, %arg7: memref<1xf32, #tpu.memory_space<smem>>, %arg8: memref<1x8xf32, #tpu.memory_space<vmem>>) attributes {dimension_semantics = [#tpu.dimension_semantics<parallel>], iteration_bounds = array<i64: 1>, scalar_prefetch = 0 : i64, scratch_operands = 0 : i64, tpu.core_type = #tpu.core_type<tc>, window_params = [{transform_indices = @transform_0, window_bounds = array<i64: 8, 33>}, {pipeline_mode = #tpu.pipeline_mode<synchronous>, transform_indices = @transform_1, window_bounds = array<i64: 33, 64>}, {pipeline_mode = #tpu.pipeline_mode<synchronous>, transform_indices = @transform_2, window_bounds = array<i64: 1, 64>}, {pipeline_mode = #tpu.pipeline_mode<synchronous>, transform_indices = @transform_3, window_bounds = array<i64: 64, 32>}, {pipeline_mode = #tpu.pipeline_mode<synchronous>, transform_indices = @transform_4, window_bounds = array<i64: 1, 32>}, {pipeline_mode = #tpu.pipeline_mode<synchronous>, transform_indices = @transform_5, window_bounds = array<i64: 1, 32>}, {transform_indices = @transform_6, window_bounds = array<i64: 1>}, {transform_indices = @transform_7, window_bounds = array<i64: 1, 8>}]} {
    %c0 = arith.constant 0 : index
    %c0_0 = arith.constant 0 : index
    %0 = vector.load %arg1[%c0, %c0_0] : memref<8x33xf32, #tpu.memory_space<vmem>>, vector<8x33xf32>
    %c0_1 = arith.constant 0 : index
    %c0_2 = arith.constant 0 : index
    %1 = vector.load %arg2[%c0_1, %c0_2] : memref<33x64xf32, #tpu.memory_space<vmem>>, vector<33x64xf32>
    %cst = arith.constant dense<0.000000e+00> : vector<8x64xf32>
    %2 = tpu.matmul %0, %1, %cst {dimension_numbers = #tpu.dot_dimension_numbers<[1], [0], [0], [1], [0, 0, 1, 1], [], []>} : vector<8x33xf32>, vector<33x64xf32>, vector<8x64xf32> -> vector<8x64xf32>
    %c0_3 = arith.constant 0 : index
    %c0_4 = arith.constant 0 : index
    %3 = vector.load %arg3[%c0_3, %c0_4] : memref<1x64xf32, #tpu.memory_space<vmem>>, vector<1x64xf32>
    %4 = vector.broadcast %3 : vector<1x64xf32> to vector<8x64xf32>
    %5 = arith.addf %2, %4 : vector<8x64xf32>
    %cst_5 = arith.constant 0.000000e+00 : f32
    %6 = vector.broadcast %cst_5 : f32 to vector<8x64xf32>
    %7 = arith.maximumf %5, %6 : vector<8x64xf32>
    %c0_6 = arith.constant 0 : index
    %c0_7 = arith.constant 0 : index
    %8 = vector.load %arg4[%c0_6, %c0_7] : memref<64x32xf32, #tpu.memory_space<vmem>>, vector<64x32xf32>
    %cst_8 = arith.constant dense<0.000000e+00> : vector<8x32xf32>
    %9 = tpu.matmul %7, %8, %cst_8 {dimension_numbers = #tpu.dot_dimension_numbers<[1], [0], [0], [1], [0, 0, 1, 1], [], []>} : vector<8x64xf32>, vector<64x32xf32>, vector<8x32xf32> -> vector<8x32xf32>
    %c0_9 = arith.constant 0 : index
    %c0_10 = arith.constant 0 : index
    %10 = vector.load %arg5[%c0_9, %c0_10] : memref<1x32xf32, #tpu.memory_space<vmem>>, vector<1x32xf32>
    %11 = vector.broadcast %10 : vector<1x32xf32> to vector<8x32xf32>
    %12 = arith.addf %9, %11 : vector<8x32xf32>
    %cst_11 = arith.constant 0.000000e+00 : f32
    %13 = vector.broadcast %cst_11 : f32 to vector<8x32xf32>
    %14 = arith.maximumf %12, %13 : vector<8x32xf32>
    %c0_12 = arith.constant 0 : index
    %c0_13 = arith.constant 0 : index
    %15 = vector.load %arg6[%c0_12, %c0_13] : memref<1x32xf32, #tpu.memory_space<vmem>>, vector<1x32xf32>
    %cst_14 = arith.constant dense<0.000000e+00> : vector<1x8xf32>
    %16 = tpu.matmul %15, %14, %cst_14 {dimension_numbers = #tpu.dot_dimension_numbers<[1], [1], [0], [0], [0, 0, 1, 0], [], []>} : vector<1x32xf32>, vector<8x32xf32>, vector<1x8xf32> -> vector<1x8xf32>
    %c0_15 = arith.constant 0 : index
    %17 = memref.load %arg7[%c0_15] : memref<1xf32, #tpu.memory_space<smem>>
    %18 = vector.broadcast %17 : f32 to vector<1x8xf32>
    %19 = arith.addf %16, %18 : vector<1x8xf32>
    %c0_16 = arith.constant 0 : index
    %c0_17 = arith.constant 0 : index
    %20 = vector.load %arg8[%c0_16, %c0_17] : memref<1x8xf32, #tpu.memory_space<vmem>>, vector<1x8xf32>
    tpu.vector_store %arg8[%c0_16, %c0_17], %19 {strides = array<i32>} : memref<1x8xf32, #tpu.memory_space<vmem>>, vector<1x8xf32>,
    return
  }
  func.func @transform_0(%arg0: i32) -> (i32, i32) {
    %c0_i32 = arith.constant 0 : i32
    %c0_i32_0 = arith.constant 0 : i32
    return %arg0, %c0_i32 : i32, i32
  }
  func.func @transform_1(%arg0: i32) -> (i32, i32) {
    %c0_i32 = arith.constant 0 : i32
    %c0_i32_0 = arith.constant 0 : i32
    %c0_i32_1 = arith.constant 0 : i32
    return %c0_i32, %c0_i32_0 : i32, i32
  }
  func.func @transform_2(%arg0: i32) -> (i32, i32) {
    %c0_i32 = arith.constant 0 : i32
    %c0_i32_0 = arith.constant 0 : i32
    %c0_i32_1 = arith.constant 0 : i32
    return %c0_i32, %c0_i32_0 : i32, i32
  }
  func.func @transform_3(%arg0: i32) -> (i32, i32) {
    %c0_i32 = arith.constant 0 : i32
    %c0_i32_0 = arith.constant 0 : i32
    %c0_i32_1 = arith.constant 0 : i32
    return %c0_i32, %c0_i32_0 : i32, i32
  }
  func.func @transform_4(%arg0: i32) -> (i32, i32) {
    %c0_i32 = arith.constant 0 : i32
    %c0_i32_0 = arith.constant 0 : i32
    %c0_i32_1 = arith.constant 0 : i32
    return %c0_i32, %c0_i32_0 : i32, i32
  }
  func.func @transform_5(%arg0: i32) -> (i32, i32) {
    %c0_i32 = arith.constant 0 : i32
    %c0_i32_0 = arith.constant 0 : i32
    %c0_i32_1 = arith.constant 0 : i32
    return %c0_i32, %c0_i32_0 : i32, i32
  }
  func.func @transform_6(%arg0: i32) -> i32 {
    %c0_i32 = arith.constant 0 : i32
    %c0_i32_0 = arith.constant 0 : i32
    return %c0_i32 : i32
  }
  func.func @transform_7(%arg0: i32) -> (i32, i32) {
    %c0_i32 = arith.constant 0 : i32
    %c0_i32_0 = arith.constant 0 : i32
    return %c0_i32, %arg0 : i32, i32
  }
}

</mosaic_0001>

<llo_original>
// kernel: tpu_custom_call.1
$region0: #{tpu_custom_call.1}
  #allocation0 [shape = 'u32[]', space=smem, size = 0x4, offset = 0x4, fixed_abs, tag = 'smem constant byte address 0x4 - core index']
  #allocation1 [shape = 'u32[144,128]{1,0:T(1,128)}', space=vmem, size = 0x12000, scoped, tag = 'internal scratch']
  #allocation2 [shape = 'f32[1]{0:T(128)S(6)}', space=smem, size = 0x200, scoped, tag = 'scoped memory for tpu_custom_call.1']
  %s0 = inlined_call_operand.vmem [shape: f32[8,33], index: 0, kind: input, shape index: {}]
  %s1 = inlined_call_operand.vmem [shape: f32[33,64], index: 1, kind: input, shape index: {}]
  %s2 = inlined_call_operand.vmem [shape: f32[1,64], index: 2, kind: input, shape index: {}]
  %s3 = inlined_call_operand.vmem [shape: f32[64,32], index: 3, kind: input, shape index: {}]
  %s4 = inlined_call_operand.vmem [shape: f32[1,32], index: 4, kind: input, shape index: {}]
  %s5 = inlined_call_operand.vmem [shape: f32[1,32], index: 5, kind: input, shape index: {}]
  %s6 = inlined_call_operand.<no memory space> [shape: f32[1], index: 6, kind: input, shape index: {}]
  %s7 = inlined_call_operand.hbm [shape: f32[1,8], index: 7, kind: output, shape index: {}]
  %s8 = sld [smem:[#allocation0]]
  $region38: #{tpu_custom_call.1} parent=0
    _
  %s10 = ssub.s32 1, %s8
  %s11 = scalar_select 0, %s10, %s8
  %12 = sst [smem:[#allocation2]] %s6
  $region1: #{tpu_custom_call.1} parent=0
    #allocation3 [shape = 'u8[512]{0}', space=vmem, size = 0x400, scoped, tag = 'output window, operand 0, single buffered']
    #allocation4 [shape = 's32[1]{0}', space=sflag, size = 0x4, scoped, tag = 'scoped memory for tpu_custom_call.1']
    %13 = vsyncpa [#allocation4], 0
    // Predicated region
    $region2: #{tpu_custom_call.1} parent=1 // pred_check
      _
    $region3: #{tpu_custom_call.1} parent=1 // pred_check_branch
      %15 = sbr.rel (0) target = $region5
    $region4: #{tpu_custom_call.1} parent=1 // pred_region
      _
    $region5: #{tpu_custom_call.1} parent=1 // pred_fallthru
      _
    // Predicated region
    $region6: #{tpu_custom_call.1} parent=1 // pred_check
      _
    $region7: #{tpu_custom_call.1} parent=1 // pred_check_branch
      %17 = sbr.rel (0) target = $region9
    $region8: #{tpu_custom_call.1} parent=1 // pred_region
      _
    $region9: #{tpu_custom_call.1} parent=1 // pred_fallthru
      _
    // Predicated region
    $region10: #{tpu_custom_call.1} parent=1 // pred_check
      _
    $region11: #{tpu_custom_call.1} parent=1 // pred_check_branch
      %19 = sbr.rel (0) target = $region13
    $region12: #{tpu_custom_call.1} parent=1 // pred_region
      _
    $region13: #{tpu_custom_call.1} parent=1 // pred_fallthru
      _
    // Predicated region
    $region14: #{tpu_custom_call.1} parent=1 // pred_check
      _
    $region15: #{tpu_custom_call.1} parent=1 // pred_check_branch
      %21 = sbr.rel (0) target = $region17
    $region16: #{tpu_custom_call.1} parent=1 // pred_region
      _
    $region17: #{tpu_custom_call.1} parent=1 // pred_fallthru
      _
    // Predicated region
    $region18: #{tpu_custom_call.1} parent=1 // pred_check
      _
    $region19: #{tpu_custom_call.1} parent=1 // pred_check_branch
      %23 = sbr.rel (0) target = $region21
    $region20: #{tpu_custom_call.1} parent=1 // pred_region
      _
    $region21: #{tpu_custom_call.1} parent=1 // pred_fallthru
      _
    // Predicated region
    $region22: #{tpu_custom_call.1} parent=1 // pred_check
      _
    $region23: #{tpu_custom_call.1} parent=1 // pred_check_branch
      %25 = sbr.rel (0) target = $region25
    $region24: #{tpu_custom_call.1} parent=1 // pred_region
      _
    $region25: #{tpu_custom_call.1} parent=1 // pred_fallthru
      _
    // Predicated region
    $region26: #{tpu_custom_call.1} parent=1 // pred_check
      _
    $region27: #{tpu_custom_call.1} parent=1 // pred_check_branch
      %27 = sbr.rel (0) target = $region29
    $region28: #{tpu_custom_call.1} parent=1 // pred_region
      _
    $region29: #{tpu_custom_call.1} parent=1 // pred_fallthru
      _
    %v28 = vld [vmem:[%s0] sm:$0xff]
    %v29 = vld [vmem:[%s1] sm:$0xff]
    %v30 = vld [vmem:[%s1 + $0x8] sm:$0xff]
    %v31 = vld [vmem:[%s1 + $0x10] sm:$0xff]
    %v32 = vld [vmem:[%s1 + $0x18] sm:$0xff]
    %v33 = vld [vmem:[%s1 + $0x20] sm:$0x1]
    %v34 = vld [vmem:[%s2] sm:$0x1]
    %v36 = vlaneseq
    %v37 = vshrl.u32 %v36, 7
    %v38 = vsub.s32 0, %v37
    %v39 = vrot.slane %v34, %v38
    %vm41 = vcmask 269312
    %v43 = vsel %vm41, %v28, 0
    %vm45 = vcmask 1040384
    %v47 = vsel %vm45, %v33, 0
    %49 = vmatprep.subr.mxu0 0.0
    %50 = vmatpush1.msra.mxu0 0.0
    %51 = vmatprep.subr.mxu0 0.0
    %52 = vmatpush1.msra.mxu0 0.0
    %53 = vmatprep.subr.mxu0 0.0
    %54 = vmatpush1.msra.mxu0 0.0
    %55 = vmatprep.subr.mxu0 0.0
    %56 = vmatpush1.msra.mxu0 0.0
    %57 = vmatprep.subr.mxu0 0.0
    %58 = vmatpush1.msra.mxu0 0.0
    %59 = vmatprep.subr.mxu0 0.0
    %60 = vmatpush1.msra.mxu0 0.0
    %61 = vmatprep.subr.mxu0 0.0
    %62 = vmatpush1.msra.mxu0 0.0
    %63 = vmatprep.subr.mxu0 0.0
    %64 = vmatpush1.msra.mxu0 0.0
    %65 = vmatprep.subr.mxu0 0.0
    %66 = vmatpush1.msra.mxu0 0.0
    %67 = vmatprep.subr.mxu0 0.0
    %68 = vmatpush1.msra.mxu0 0.0
    %69 = vmatprep.subr.mxu0 0.0
    %70 = vmatpush1.msra.mxu0 0.0
    %71 = vmatprep.subr.mxu0 0.0
    %72 = vmatpush1.msra.mxu0 %v47
    %73 = vmatprep.subr.mxu0 0.0
    %74 = vmatpush1.msra.mxu0 %v32
    %75 = vmatprep.subr.mxu0 0.0
    %76 = vmatpush1.msra.mxu0 %v31
    %77 = vmatprep.subr.mxu0 0.0
    %78 = vmatpush1.msra.mxu0 %v30
    %79 = vmatprep.subr.mxu0 0.0
    %80 = vmatpush1.msra.mxu0 %v29
    %81 = vmatprep.subr.mxu0 0.0
    %82 = vmatpush2.msra.mxu0 0.0
    %83 = vmatprep.subr.mxu0 0.0
    %84 = vmatpush2.msra.mxu0 0.0
    %85 = vmatprep.subr.mxu0 0.0
    %86 = vmatpush2.msra.mxu0 0.0
    %87 = vmatprep.subr.mxu0 0.0
    %88 = vmatpush2.msra.mxu0 0.0
    %89 = vmatprep.subr.mxu0 0.0
    %90 = vmatpush2.msra.mxu0 0.0
    %91 = vmatprep.subr.mxu0 0.0
    %92 = vmatpush2.msra.mxu0 0.0
    %93 = vmatprep.subr.mxu0 0.0
    %94 = vmatpush2.msra.mxu0 0.0
    %95 = vmatprep.subr.mxu0 0.0
    %96 = vmatpush2.msra.mxu0 0.0
    %97 = vmatprep.subr.mxu0 0.0
    %98 = vmatpush2.msra.mxu0 0.0
    %99 = vmatprep.subr.mxu0 0.0
    %100 = vmatpush2.msra.mxu0 0.0
    %101 = vmatprep.subr.mxu0 0.0
    %102 = vmatpush2.msra.mxu0 0.0
    %103 = vmatprep.subr.mxu0 0.0
    %104 = vmatpush2.msra.mxu0 0.0
    %105 = vmatprep.subr.mxu0 0.0
    %106 = vmatpush2.msra.mxu0 0.0
    %107 = vmatprep.subr.mxu0 0.0
    %108 = vmatpush2.msra.mxu0 0.0
    %109 = vmatprep.subr.mxu0 0.0
    %110 = vmatpush2.msra.mxu0 0.0
    %111 = vmatprep.subr.mxu0 0.0
    %112 = vmatpush2.msra.mxu0 0.0
    %113 = vmatprep.mubr.f32.mxu0 0.0
    %114 = vmatmul.mubr.f32.gmra.mxu0 %v43
    %v115 = vpop.f32.mrf.mxu0
    %v116 = vadd.f32 %v39, %v115
    %v117 = vpop.f32.mrf.mxu0
    %118 = vdwg.mxu0
    %v119 = vmax.f32 %v116, 0.0
    %v120 = vld [vmem:[%s3] sm:$0xff]
    %v121 = vld [vmem:[%s3 + $0x8] sm:$0xff]
    %v122 = vld [vmem:[%s3 + $0x10] sm:$0xff]
    %v123 = vld [vmem:[%s3 + $0x18] sm:$0xff]
    %v124 = vld [vmem:[%s3 + $0x20] sm:$0xff]
    %v125 = vld [vmem:[%s3 + $0x28] sm:$0xff]
    %v126 = vld [vmem:[%s3 + $0x30] sm:$0xff]
    %v127 = vld [vmem:[%s3 + $0x38] sm:$0xff]
    %v128 = vld [vmem:[%s4] sm:$0x1]
    %v130 = vlaneseq
    %v131 = vshrl.u32 %v130, 7
    %v132 = vsub.s32 0, %v131
    %v133 = vrot.slane %v128, %v132
    %vm135 = vcmask 523264
    %v137 = vsel %vm135, %v119, 0
    %139 = vmatprep.subr.mxu0 0.0
    %140 = vmatpush1.msra.mxu0 0.0
    %141 = vmatprep.subr.mxu0 0.0
    %142 = vmatpush1.msra.mxu0 0.0
    %143 = vmatprep.subr.mxu0 0.0
    %144 = vmatpush1.msra.mxu0 0.0
    %145 = vmatprep.subr.mxu0 0.0
    %146 = vmatpush1.msra.mxu0 0.0
    %147 = vmatprep.subr.mxu0 0.0
    %148 = vmatpush1.msra.mxu0 0.0
    %149 = vmatprep.subr.mxu0 0.0
    %150 = vmatpush1.msra.mxu0 0.0
    %151 = vmatprep.subr.mxu0 0.0
    %152 = vmatpush1.msra.mxu0 0.0
    %153 = vmatprep.subr.mxu0 0.0
    %154 = vmatpush1.msra.mxu0 0.0
    %155 = vmatprep.subr.mxu0 0.0
    %156 = vmatpush1.msra.mxu0 %v127
    %157 = vmatprep.subr.mxu0 0.0
    %158 = vmatpush1.msra.mxu0 %v126
    %159 = vmatprep.subr.mxu0 0.0
    %160 = vmatpush1.msra.mxu0 %v125
    %161 = vmatprep.subr.mxu0 0.0
    %162 = vmatpush1.msra.mxu0 %v124
    %163 = vmatprep.subr.mxu0 0.0
    %164 = vmatpush1.msra.mxu0 %v123
    %165 = vmatprep.subr.mxu0 0.0
    %166 = vmatpush1.msra.mxu0 %v122
    %167 = vmatprep.subr.mxu0 0.0
    %168 = vmatpush1.msra.mxu0 %v121
    %169 = vmatprep.subr.mxu0 0.0
    %170 = vmatpush1.msra.mxu0 %v120
    %171 = vmatprep.subr.mxu0 0.0
    %172 = vmatpush2.msra.mxu0 0.0
    %173 = vmatprep.subr.mxu0 0.0
    %174 = vmatpush2.msra.mxu0 0.0
    %175 = vmatprep.subr.mxu0 0.0
    %176 = vmatpush2.msra.mxu0 0.0
    %177 = vmatprep.subr.mxu0 0.0
    %178 = vmatpush2.msra.mxu0 0.0
    %179 = vmatprep.subr.mxu0 0.0
    %180 = vmatpush2.msra.mxu0 0.0
    %181 = vmatprep.subr.mxu0 0.0
    %182 = vmatpush2.msra.mxu0 0.0
    %183 = vmatprep.subr.mxu0 0.0
    %184 = vmatpush2.msra.mxu0 0.0
    %185 = vmatprep.subr.mxu0 0.0
    %186 = vmatpush2.msra.mxu0 0.0
    %187 = vmatprep.subr.mxu0 0.0
    %188 = vmatpush2.msra.mxu0 0.0
    %189 = vmatprep.subr.mxu0 0.0
    %190 = vmatpush2.msra.mxu0 0.0
    %191 = vmatprep.subr.mxu0 0.0
    %192 = vmatpush2.msra.mxu0 0.0
    %193 = vmatprep.subr.mxu0 0.0
    %194 = vmatpush2.msra.mxu0 0.0
    %195 = vmatprep.subr.mxu0 0.0
    %196 = vmatpush2.msra.mxu0 0.0
    %197 = vmatprep.subr.mxu0 0.0
    %198 = vmatpush2.msra.mxu0 0.0
    %199 = vmatprep.subr.mxu0 0.0
    %200 = vmatpush2.msra.mxu0 0.0
    %201 = vmatprep.subr.mxu0 0.0
    %202 = vmatpush2.msra.mxu0 0.0
    %203 = vmatprep.mubr.f32.mxu0 0.0
    %204 = vmatmul.mubr.f32.gmra.mxu0 %v137
    %v205 = vpop.f32.mrf.mxu0
    %v206 = vadd.f32 %v133, %v205
    %v207 = vpop.f32.mrf.mxu0
    %208 = vdwg.mxu0
    %v209 = vmax.f32 %v206, 0.0
    %v210 = vld [vmem:[%s5] sm:$0x1]
    %s211 = sld [smem:[#allocation2]]
    %v212 = vstv %s211
    %vm213 = vcmask 261120
    %v215 = vsel %vm213, %v210, 0
    %v218 = vsel %vm213, %v209, 0
    %220 = vmatprep.subr.mxu0 0.0
    %221 = vmatpush1.xpose.msra.mxu0 0.0
    %222 = vmatprep.subr.mxu0 0.0
    %223 = vmatpush1.xpose.msra.mxu0 0.0
    %224 = vmatprep.subr.mxu0 0.0
    %225 = vmatpush1.xpose.msra.mxu0 0.0
    %226 = vmatprep.subr.mxu0 0.0
    %227 = vmatpush1.xpose.msra.mxu0 0.0
    %228 = vmatprep.subr.mxu0 0.0
    %229 = vmatpush1.xpose.msra.mxu0 0.0
    %230 = vmatprep.subr.mxu0 0.0
    %231 = vmatpush1.xpose.msra.mxu0 0.0
    %232 = vmatprep.subr.mxu0 0.0
    %233 = vmatpush1.xpose.msra.mxu0 0.0
    %234 = vmatprep.subr.mxu0 0.0
    %235 = vmatpush1.xpose.msra.mxu0 0.0
    %236 = vmatprep.subr.mxu0 0.0
    %237 = vmatpush1.xpose.msra.mxu0 0.0
    %238 = vmatprep.subr.mxu0 0.0
    %239 = vmatpush1.xpose.msra.mxu0 0.0
    %240 = vmatprep.subr.mxu0 0.0
    %241 = vmatpush1.xpose.msra.mxu0 0.0
    %242 = vmatprep.subr.mxu0 0.0
    %243 = vmatpush1.xpose.msra.mxu0 0.0
    %244 = vmatprep.subr.mxu0 0.0
    %245 = vmatpush1.xpose.msra.mxu0 0.0
    %246 = vmatprep.subr.mxu0 0.0
    %247 = vmatpush1.xpose.msra.mxu0 0.0
    %248 = vmatprep.subr.mxu0 0.0
    %249 = vmatpush1.xpose.msra.mxu0 0.0
    %250 = vmatprep.subr.mxu0 0.0
    %251 = vmatpush1.xpose.msra.mxu0 %v218
    %252 = vmatprep.subr.mxu0 0.0
    %253 = vmatpush2.xpose.msra.mxu0 0.0
    %254 = vmatprep.subr.mxu0 0.0
    %255 = vmatpush2.xpose.msra.mxu0 0.0
    %256 = vmatprep.subr.mxu0 0.0
    %257 = vmatpush2.xpose.msra.mxu0 0.0
    %258 = vmatprep.subr.mxu0 0.0
    %259 = vmatpush2.xpose.msra.mxu0 0.0
    %260 = vmatprep.subr.mxu0 0.0
    %261 = vmatpush2.xpose.msra.mxu0 0.0
    %262 = vmatprep.subr.mxu0 0.0
    %263 = vmatpush2.xpose.msra.mxu0 0.0
    %264 = vmatprep.subr.mxu0 0.0
    %265 = vmatpush2.xpose.msra.mxu0 0.0
    %266 = vmatprep.subr.mxu0 0.0
    %267 = vmatpush2.xpose.msra.mxu0 0.0
    %268 = vmatprep.subr.mxu0 0.0
    %269 = vmatpush2.xpose.msra.mxu0 0.0
    %270 = vmatprep.subr.mxu0 0.0
    %271 = vmatpush2.xpose.msra.mxu0 0.0
    %272 = vmatprep.subr.mxu0 0.0
    %273 = vmatpush2.xpose.msra.mxu0 0.0
    %274 = vmatprep.subr.mxu0 0.0
    %275 = vmatpush2.xpose.msra.mxu0 0.0
    %276 = vmatprep.subr.mxu0 0.0
    %277 = vmatpush2.xpose.msra.mxu0 0.0
    %278 = vmatprep.subr.mxu0 0.0
    %279 = vmatpush2.xpose.msra.mxu0 0.0
    %280 = vmatprep.subr.mxu0 0.0
    %281 = vmatpush2.xpose.msra.mxu0 0.0
    %282 = vmatprep.subr.mxu0 0.0
    %283 = vmatpush2.xpose.msra.mxu0 0.0
    %284 = vmatprep.mubr.f32.mxu0 0.0
    %285 = vmatmul.mubr.f32.gmra.mxu0 %v215
    %v286 = vpop.f32.mrf.mxu0
    %v287 = vadd.f32 %v212, %v286
    %v288 = vpop.f32.mrf.mxu0
    %289 = vdwg.mxu0
    %vm290 = vcmask 57344
    %291 = vst.msk [vmem:[#allocation3] sm:$0x1] %vm290, %v287
    // Predicated region
    $region30: #{tpu_custom_call.1} parent=1 // pred_check
      _
    $region31: #{tpu_custom_call.1} parent=1 // pred_check_branch
      %293 = sbr.rel (0) target = $region33
    $region32: #{tpu_custom_call.1} parent=1 // pred_region
      %s295 = ssub.s32 16, 16
      %296 = vsyncadd [#allocation4], %s295
      %s298 = sshll.u32 [#allocation3], 4
      %s299 = int_to_ptr.vmem [resolvable:$true] %s298
      %301 = dma.vmem_to_hbm [thread:$0]  %s299, 16, %s7, [#allocation4]
    $region33: #{tpu_custom_call.1} parent=1 // pred_fallthru
      _
    // Predicated region
    $region34: #{tpu_custom_call.1} parent=1 // pred_check
      _
    $region35: #{tpu_custom_call.1} parent=1 // pred_check_branch
      %303 = sbr.rel (0) target = $region37
    $region36: #{tpu_custom_call.1} parent=1 // pred_region
      %304 = dma.done [#allocation4], 16
    $region37: #{tpu_custom_call.1} parent=1 // pred_fallthru
      _
    %305 = vsyncpa [#allocation4], 1

</llo_original>
